<compile_context>
chip_gen: v6e
topology: v6e:2x2x1
jax: 0.10.0
libtpu: 0.0.40
codegen_flags: <defaults>
</compile_context>

<pallas_src>
import functools

import jax
import jax.numpy as jnp
from jax.experimental import pallas as pl
from jax.experimental.pallas import tpu as pltpu


def _round_up(x, m):
    return (x + m - 1) // m * m


def mlp_md_kernel(x_ref, sub_ref, mul_ref, w_in_ref, b_in_ref,
                  w_h_ref, b_h_ref, o_ref):
    """Fused MLP_MD forward on one batch tile.

    x_ref   : (TB, in_pad)       bf16 flattened input tile
    sub_ref : (TB, md_size)      f32 context encoding tile
    mul_ref : (md_size, hid_pad) f32 multiplicative gate matrix (resident)
    w_in_ref: (in_pad, hid_pad)  bf16   b_in_ref: (1, hid_pad) f32 (resident)
    w_h_ref : (hid_pad, hid_pad) bf16   b_h_ref : (1, hid_pad) f32 (resident)
    o_ref   : (TB, hid_pad)      f32 output tile
    """
    # gates = sub_id @ mul_gates   (TB, hid_pad), f32.  K = md_size is tiny but
    # kept as a matmul so soft (non-one-hot) encodings keep module semantics.
    gates = jnp.dot(sub_ref[...], mul_ref[...],
                    preferred_element_type=jnp.float32)

    # x = relu(input2h(x))  -- bf16 operands, f32 accumulation, f32 elementwise.
    h1 = jnp.dot(x_ref[...], w_in_ref[...],
                 preferred_element_type=jnp.float32) + b_in_ref[...]
    h1 = jnp.maximum(h1, 0.0)

    # x_gated = gates * x   (f32), cast once for the second MXU pass.
    xg = (gates * h1).astype(jnp.bfloat16)

    # x = relu(h2h1(x_gated))
    h2 = jnp.dot(xg, w_h_ref[...],
                 preferred_element_type=jnp.float32) + b_h_ref[...]
    h2 = jnp.maximum(h2, 0.0)

    # x_gated = gates * x ; x = relu(x_gated)  (relu kept for exact semantics)
    o_ref[...] = jnp.maximum(gates * h2, 0.0)


def _vmem_budget_bytes(tb, in_p, md, hid_p):
    """Rough VMEM budget: double-buffered activation tiles + resident weights."""
    act_in = tb * in_p * 2 + tb * md * 4        # x (bf16) + sub (f32)
    act_out = tb * hid_p * 4                    # out (f32)
    weights = (md * hid_p * 4                   # mul_gates (f32)
               + in_p * hid_p * 2 + hid_p * 4   # w_in (bf16) + b_in (f32)
               + hid_p * hid_p * 2 + hid_p * 4)  # w_h (bf16) + b_h (f32)
    total = 2 * (act_in + act_out) + 2 * weights
    total += 8 << 20                            # intermediates / scratch headroom
    # Clamp under v7x's 64 MiB physical VMEM (tiles are sized to fit anyway).
    return int(min(max(total, 16 << 20), 48 << 20))


@functools.partial(jax.jit, static_argnames=("batch_tile",))
def mlp_md_forward(inp, sub_id, params, *, batch_tile=512):
    """inp: (batch, h, w) -> returns (x, 0) exactly like the PyTorch module."""
    b, h, w = inp.shape
    in_size = h * w

    mul_gates, w_in, b_in, w_h, b_h = params
    hidden = w_in.shape[1]
    md = mul_gates.shape[0]

    # Lane-dense feature dims (multiples of 128); batch tile multiple of 16.
    in_p = _round_up(in_size, 128)
    hid_p = _round_up(hidden, 128)
    tb = batch_tile if b >= batch_tile else _round_up(b, 16)
    b_p = _round_up(b, tb)

    # --- pad + cast activations ---------------------------------------------
    x = inp.reshape(b, in_size).astype(jnp.float32)
    x = jnp.pad(x, ((0, b_p - b), (0, in_p - in_size))).astype(jnp.bfloat16)
    sub = jnp.pad(sub_id.astype(jnp.float32), ((0, b_p - b), (0, 0)))

    # --- pad + cast parameters (zero padding is transparent to the math) -----
    mulg = jnp.pad(mul_gates.astype(jnp.float32), ((0, 0), (0, hid_p - hidden)))
    w_in_p = jnp.pad(w_in.astype(jnp.float32),
                     ((0, in_p - in_size), (0, hid_p - hidden))).astype(jnp.bfloat16)
    b_in_p = jnp.pad(b_in.astype(jnp.float32), ((0, 0), (0, hid_p - hidden)))
    w_h_p = jnp.pad(w_h.astype(jnp.float32),
                    ((0, hid_p - hidden), (0, hid_p - hidden))).astype(jnp.bfloat16)
    b_h_p = jnp.pad(b_h.astype(jnp.float32), ((0, 0), (0, hid_p - hidden)))

    grid = (b_p // tb,)

    out = pl.pallas_call(
        mlp_md_kernel,
        out_shape=jax.ShapeDtypeStruct((b_p, hid_p), jnp.float32),
        grid=grid,
        in_specs=[
            pl.BlockSpec((tb, in_p), lambda i: (i, 0)),      # x tile
            pl.BlockSpec((tb, md), lambda i: (i, 0)),        # sub_id tile
            pl.BlockSpec((md, hid_p), lambda i: (0, 0)),     # mul_gates (resident)
            pl.BlockSpec((in_p, hid_p), lambda i: (0, 0)),   # w_in (resident)
            pl.BlockSpec((1, hid_p), lambda i: (0, 0)),      # b_in (resident)
            pl.BlockSpec((hid_p, hid_p), lambda i: (0, 0)),  # w_h (resident)
            pl.BlockSpec((1, hid_p), lambda i: (0, 0)),      # b_h (resident)
        ],
        out_specs=pl.BlockSpec((tb, hid_p), lambda i: (i, 0)),
        compiler_params=pltpu.CompilerParams(
            dimension_semantics=("parallel",),
            vmem_limit_bytes=_vmem_budget_bytes(tb, in_p, md, hid_p),
        ),
    )(x, sub, mulg, w_in_p, b_in_p, w_h_p, b_h_p)

    return out[:b, :hidden], 0


def make_params(key, input_size, hidden_size, md_size,
                gates_sparsity=0.5, gates_mean=1.0, gates_std=0.1):
    """Deterministic synthetic parameter init (mirrors shapes in __init__)."""
    k_g, k_m, k_wi, k_bi, k_wh, k_bh = jax.random.split(key, 6)

    # mul_gates: sparse_with_mean(...) then relu  -> (md_size, hidden_size)
    vals = gates_mean + gates_std * jax.random.normal(k_g, (md_size, hidden_size))
    mask = jax.random.uniform(k_m, (md_size, hidden_size)) >= gates_sparsity
    mul_gates = jnp.maximum(jnp.where(mask, vals, 0.0), 0.0).astype(jnp.float32)

    # nn.Linear(input_size, hidden_size): uniform(-1/sqrt(in), 1/sqrt(in)),
    # stored transposed as (in, out) so the kernel computes x @ W + b.
    lim_in = 1.0 / jnp.sqrt(float(input_size))
    w_in = jax.random.uniform(k_wi, (input_size, hidden_size),
                              minval=-lim_in, maxval=lim_in).astype(jnp.float32)
    b_in = jax.random.uniform(k_bi, (1, hidden_size),
                              minval=-lim_in, maxval=lim_in).astype(jnp.float32)

    lim_h = 1.0 / jnp.sqrt(float(hidden_size))
    w_h = jax.random.uniform(k_wh, (hidden_size, hidden_size),
                             minval=-lim_h, maxval=lim_h).astype(jnp.float32)
    b_h = jax.random.uniform(k_bh, (1, hidden_size),
                             minval=-lim_h, maxval=lim_h).astype(jnp.float32)

    return mul_gates, w_in, b_in, w_h, b_h


def reference_forward(inp, sub_id, params):
    """Pure-JAX reference mirroring the PyTorch semantics (same bf16/f32 mix)."""
    mul_gates, w_in, b_in, w_h, b_h = params
    b, h, w = inp.shape
    x = inp.reshape(b, h * w)
    gates = jnp.dot(sub_id.astype(jnp.float32), mul_gates.astype(jnp.float32))
    h1 = jnp.dot(x.astype(jnp.bfloat16), w_in.astype(jnp.bfloat16),
                 preferred_element_type=jnp.float32) + b_in
    h1 = jnp.maximum(h1, 0.0)
    xg = (gates * h1).astype(jnp.bfloat16)
    h2 = jnp.dot(xg, w_h.astype(jnp.bfloat16),
                 preferred_element_type=jnp.float32) + b_h
    h2 = jnp.maximum(h2, 0.0)
    return jnp.maximum(gates * h2, 0.0), 0


if __name__ == "__main__":
    key = jax.random.PRNGKey(0)
    k_in, k_sub, k_par = jax.random.split(key, 3)

    # Small shapes consistent with the forward: input is (batch, h, w),
    # flattened to input_size = h*w.
    batch, h, w = 4, 4, 8
    input_size = h * w          # 32
    hidden_size = 32
    md_size = 4

    inp = jax.random.normal(k_in, (batch, h, w), dtype=jnp.float32)

    # sub_id: one-hot context encoding (batch, md_size)
    ctx = jax.random.randint(k_sub, (batch,), 0, md_size)
    sub_id = jax.nn.one_hot(ctx, md_size, dtype=jnp.float32)

    params = make_params(k_par, input_size, hidden_size, md_size)

    out, _ = mlp_md_forward(inp, sub_id, params)
    out = jax.block_until_ready(out)

    ref, _ = reference_forward(inp, sub_id, params)
    assert out.shape == (batch, hidden_size)
    assert jnp.allclose(out, ref, atol=2e-3, rtol=2e-3), "mismatch vs reference"

    print("KERNEL_OK")
</pallas_src>

<mosaic_0001>
module attributes {stable_mosaic.version = 11 : i64} {
  func.func @mlp_md_kernel(%arg0: i32, %arg1: memref<16x128xbf16, #tpu.memory_space<vmem>>, %arg2: memref<16x4xf32, #tpu.memory_space<vmem>>, %arg3: memref<4x128xf32, #tpu.memory_space<vmem>>, %arg4: memref<128x128xbf16, #tpu.memory_space<vmem>>, %arg5: memref<1x128xf32, #tpu.memory_space<vmem>>, %arg6: memref<128x128xbf16, #tpu.memory_space<vmem>>, %arg7: memref<1x128xf32, #tpu.memory_space<vmem>>, %arg8: memref<16x128xf32, #tpu.memory_space<vmem>>) attributes {dimension_semantics = [#tpu.dimension_semantics<parallel>], iteration_bounds = array<i64: 1>, scalar_prefetch = 0 : i64, scratch_operands = 0 : i64, tpu.core_type = #tpu.core_type<tc>, window_params = [{transform_indices = @transform_0, window_bounds = array<i64: 16, 128>}, {transform_indices = @transform_1, window_bounds = array<i64: 16, 4>}, {pipeline_mode = #tpu.pipeline_mode<synchronous>, transform_indices = @transform_2, window_bounds = array<i64: 4, 128>}, {pipeline_mode = #tpu.pipeline_mode<synchronous>, transform_indices = @transform_3, window_bounds = array<i64: 128, 128>}, {pipeline_mode = #tpu.pipeline_mode<synchronous>, transform_indices = @transform_4, window_bounds = array<i64: 1, 128>}, {pipeline_mode = #tpu.pipeline_mode<synchronous>, transform_indices = @transform_5, window_bounds = array<i64: 128, 128>}, {pipeline_mode = #tpu.pipeline_mode<synchronous>, transform_indices = @transform_6, window_bounds = array<i64: 1, 128>}, {transform_indices = @transform_7, window_bounds = array<i64: 16, 128>}]} {
    %c0 = arith.constant 0 : index
    %c0_0 = arith.constant 0 : index
    %0 = vector.load %arg2[%c0, %c0_0] : memref<16x4xf32, #tpu.memory_space<vmem>>, vector<16x4xf32>
    %c0_1 = arith.constant 0 : index
    %c0_2 = arith.constant 0 : index
    %1 = vector.load %arg3[%c0_1, %c0_2] : memref<4x128xf32, #tpu.memory_space<vmem>>, vector<4x128xf32>
    %cst = arith.constant dense<0.000000e+00> : vector<16x128xf32>
    %2 = tpu.matmul %0, %1, %cst {dimension_numbers = #tpu.dot_dimension_numbers<[1], [0], [0], [1], [0, 0, 1, 1], [], []>} : vector<16x4xf32>, vector<4x128xf32>, vector<16x128xf32> -> vector<16x128xf32>
    %c0_3 = arith.constant 0 : index
    %c0_4 = arith.constant 0 : index
    %3 = vector.load %arg1[%c0_3, %c0_4] : memref<16x128xbf16, #tpu.memory_space<vmem>>, vector<16x128xbf16>
    %c0_5 = arith.constant 0 : index
    %c0_6 = arith.constant 0 : index
    %4 = vector.load %arg4[%c0_5, %c0_6] : memref<128x128xbf16, #tpu.memory_space<vmem>>, vector<128x128xbf16>
    %cst_7 = arith.constant dense<0.000000e+00> : vector<16x128xf32>
    %5 = tpu.matmul %3, %4, %cst_7 {dimension_numbers = #tpu.dot_dimension_numbers<[1], [0], [0], [1], [0, 0, 1, 1], [], []>} : vector<16x128xbf16>, vector<128x128xbf16>, vector<16x128xf32> -> vector<16x128xf32>
    %c0_8 = arith.constant 0 : index
    %c0_9 = arith.constant 0 : index
    %6 = vector.load %arg5[%c0_8, %c0_9] : memref<1x128xf32, #tpu.memory_space<vmem>>, vector<1x128xf32>
    %7 = vector.broadcast %6 : vector<1x128xf32> to vector<16x128xf32>
    %8 = arith.addf %5, %7 : vector<16x128xf32>
    %cst_10 = arith.constant 0.000000e+00 : f32
    %9 = vector.broadcast %cst_10 : f32 to vector<16x128xf32>
    %10 = arith.maximumf %8, %9 : vector<16x128xf32>
    %11 = arith.mulf %2, %10 : vector<16x128xf32>
    %12 = arith.truncf %11 : vector<16x128xf32> to vector<16x128xbf16>
    %c0_11 = arith.constant 0 : index
    %c0_12 = arith.constant 0 : index
    %13 = vector.load %arg6[%c0_11, %c0_12] : memref<128x128xbf16, #tpu.memory_space<vmem>>, vector<128x128xbf16>
    %cst_13 = arith.constant dense<0.000000e+00> : vector<16x128xf32>
    %14 = tpu.matmul %12, %13, %cst_13 {dimension_numbers = #tpu.dot_dimension_numbers<[1], [0], [0], [1], [0, 0, 1, 1], [], []>} : vector<16x128xbf16>, vector<128x128xbf16>, vector<16x128xf32> -> vector<16x128xf32>
    %c0_14 = arith.constant 0 : index
    %c0_15 = arith.constant 0 : index
    %15 = vector.load %arg7[%c0_14, %c0_15] : memref<1x128xf32, #tpu.memory_space<vmem>>, vector<1x128xf32>
    %16 = vector.broadcast %15 : vector<1x128xf32> to vector<16x128xf32>
    %17 = arith.addf %14, %16 : vector<16x128xf32>
    %cst_16 = arith.constant 0.000000e+00 : f32
    %18 = vector.broadcast %cst_16 : f32 to vector<16x128xf32>
    %19 = arith.maximumf %17, %18 : vector<16x128xf32>
    %20 = arith.mulf %2, %19 : vector<16x128xf32>
    %cst_17 = arith.constant 0.000000e+00 : f32
    %21 = vector.broadcast %cst_17 : f32 to vector<16x128xf32>
    %22 = arith.maximumf %20, %21 : vector<16x128xf32>
    %c0_18 = arith.constant 0 : index
    %c0_19 = arith.constant 0 : index
    %23 = vector.load %arg8[%c0_18, %c0_19] : memref<16x128xf32, #tpu.memory_space<vmem>>, vector<16x128xf32>
    tpu.vector_store %arg8[%c0_18, %c0_19], %22 {strides = array<i32>} : memref<16x128xf32, #tpu.memory_space<vmem>>, vector<16x128xf32>,
    return
  }
  func.func @transform_0(%arg0: i32) -> (i32, i32) {
    %c0_i32 = arith.constant 0 : i32
    %c0_i32_0 = arith.constant 0 : i32
    return %arg0, %c0_i32 : i32, i32
  }
  func.func @transform_1(%arg0: i32) -> (i32, i32) {
    %c0_i32 = arith.constant 0 : i32
    %c0_i32_0 = arith.constant 0 : i32
    return %arg0, %c0_i32 : i32, i32
  }
  func.func @transform_2(%arg0: i32) -> (i32, i32) {
    %c0_i32 = arith.constant 0 : i32
    %c0_i32_0 = arith.constant 0 : i32
    %c0_i32_1 = arith.constant 0 : i32
    return %c0_i32, %c0_i32_0 : i32, i32
  }
  func.func @transform_3(%arg0: i32) -> (i32, i32) {
    %c0_i32 = arith.constant 0 : i32
    %c0_i32_0 = arith.constant 0 : i32
    %c0_i32_1 = arith.constant 0 : i32
    return %c0_i32, %c0_i32_0 : i32, i32
  }
  func.func @transform_4(%arg0: i32) -> (i32, i32) {
    %c0_i32 = arith.constant 0 : i32
    %c0_i32_0 = arith.constant 0 : i32
    %c0_i32_1 = arith.constant 0 : i32
    return %c0_i32, %c0_i32_0 : i32, i32
  }
  func.func @transform_5(%arg0: i32) -> (i32, i32) {
    %c0_i32 = arith.constant 0 : i32
    %c0_i32_0 = arith.constant 0 : i32
    %c0_i32_1 = arith.constant 0 : i32
    return %c0_i32, %c0_i32_0 : i32, i32
  }
  func.func @transform_6(%arg0: i32) -> (i32, i32) {
    %c0_i32 = arith.constant 0 : i32
    %c0_i32_0 = arith.constant 0 : i32
    %c0_i32_1 = arith.constant 0 : i32
    return %c0_i32, %c0_i32_0 : i32, i32
  }
  func.func @transform_7(%arg0: i32) -> (i32, i32) {
    %c0_i32 = arith.constant 0 : i32
    %c0_i32_0 = arith.constant 0 : i32
    return %arg0, %c0_i32 : i32, i32
  }
}

</mosaic_0001>

<llo_original>
// kernel: mlp_md_forward.1
$region0: #{mlp_md_forward.1}
  #allocation0 [shape = 'u32[]', space=smem, size = 0x4, offset = 0x4, fixed_abs, tag = 'smem constant byte address 0x4 - core index']
  #allocation1 [shape = 'u32[144,128]{1,0:T(1,128)}', space=vmem, size = 0x12000, scoped, tag = 'internal scratch']
  %s0 = inlined_call_operand.vmem [shape: bf16[16,128], index: 0, kind: input, shape index: {}]
  %s1 = inlined_call_operand.vmem [shape: f32[16,4], index: 1, kind: input, shape index: {}]
  %s2 = inlined_call_operand.vmem [shape: f32[4,128], index: 2, kind: input, shape index: {}]
  %s3 = inlined_call_operand.vmem [shape: bf16[128,128], index: 3, kind: input, shape index: {}]
  %s4 = inlined_call_operand.vmem [shape: f32[1,128], index: 4, kind: input, shape index: {}]
  %s5 = inlined_call_operand.vmem [shape: bf16[128,128], index: 5, kind: input, shape index: {}]
  %s6 = inlined_call_operand.vmem [shape: f32[1,128], index: 6, kind: input, shape index: {}]
  %s7 = inlined_call_operand.vmem [shape: f32[16,128], index: 7, kind: output, shape index: {}]
  %s8 = sld [smem:[#allocation0]]
  $region38: #{mlp_md_forward.1} parent=0
    _
  %s10 = ssub.s32 1, %s8
  %s11 = scalar_select 0, %s10, %s8
  // Predicated region
  $region2: #{mlp_md_forward.1} parent=0 // pred_check
    _
  $region3: #{mlp_md_forward.1} parent=0 // pred_check_branch
    %13 = sbr.rel (0) target = $region5
  $region4: #{mlp_md_forward.1} parent=0 // pred_region
    _
  $region5: #{mlp_md_forward.1} parent=0 // pred_fallthru
    _
  // Predicated region
  $region6: #{mlp_md_forward.1} parent=0 // pred_check
    _
  $region7: #{mlp_md_forward.1} parent=0 // pred_check_branch
    %15 = sbr.rel (0) target = $region9
  $region8: #{mlp_md_forward.1} parent=0 // pred_region
    _
  $region9: #{mlp_md_forward.1} parent=0 // pred_fallthru
    _
  // Predicated region
  $region10: #{mlp_md_forward.1} parent=0 // pred_check
    _
  $region11: #{mlp_md_forward.1} parent=0 // pred_check_branch
    %17 = sbr.rel (0) target = $region13
  $region12: #{mlp_md_forward.1} parent=0 // pred_region
    _
  $region13: #{mlp_md_forward.1} parent=0 // pred_fallthru
    _
  // Predicated region
  $region14: #{mlp_md_forward.1} parent=0 // pred_check
    _
  $region15: #{mlp_md_forward.1} parent=0 // pred_check_branch
    %19 = sbr.rel (0) target = $region17
  $region16: #{mlp_md_forward.1} parent=0 // pred_region
    _
  $region17: #{mlp_md_forward.1} parent=0 // pred_fallthru
    _
  // Predicated region
  $region18: #{mlp_md_forward.1} parent=0 // pred_check
    _
  $region19: #{mlp_md_forward.1} parent=0 // pred_check_branch
    %21 = sbr.rel (0) target = $region21
  $region20: #{mlp_md_forward.1} parent=0 // pred_region
    _
  $region21: #{mlp_md_forward.1} parent=0 // pred_fallthru
    _
  // Predicated region
  $region22: #{mlp_md_forward.1} parent=0 // pred_check
    _
  $region23: #{mlp_md_forward.1} parent=0 // pred_check_branch
    %23 = sbr.rel (0) target = $region25
  $region24: #{mlp_md_forward.1} parent=0 // pred_region
    _
  $region25: #{mlp_md_forward.1} parent=0 // pred_fallthru
    _
  // Predicated region
  $region26: #{mlp_md_forward.1} parent=0 // pred_check
    _
  $region27: #{mlp_md_forward.1} parent=0 // pred_check_branch
    %25 = sbr.rel (0) target = $region29
  $region28: #{mlp_md_forward.1} parent=0 // pred_region
    _
  $region29: #{mlp_md_forward.1} parent=0 // pred_fallthru
    _
  %v27 = vld [vmem:[%s1] sm:$0xff]
  %v28 = vld [vmem:[%s1 + $0x8] sm:$0xff]
  %v29 = vld [vmem:[%s2] sm:$0xf]
  %vm30 = vcmask 31744
  %v32 = vsel %vm30, %v27, 0
  %v35 = vsel %vm30, %v28, 0
  %vm37 = vcmask 1043456
  %v39 = vsel %vm37, %v29, 0
  %41 = vmatprep.subr.mxu0 0.0
  %42 = vmatpush1.msra.mxu0 0.0
  %43 = vmatprep.subr.mxu0 0.0
  %44 = vmatpush1.msra.mxu0 0.0
  %45 = vmatprep.subr.mxu0 0.0
  %46 = vmatpush1.msra.mxu0 0.0
  %47 = vmatprep.subr.mxu0 0.0
  %48 = vmatpush1.msra.mxu0 0.0
  %49 = vmatprep.subr.mxu0 0.0
  %50 = vmatpush1.msra.mxu0 0.0
  %51 = vmatprep.subr.mxu0 0.0
  %52 = vmatpush1.msra.mxu0 0.0
  %53 = vmatprep.subr.mxu0 0.0
  %54 = vmatpush1.msra.mxu0 0.0
  %55 = vmatprep.subr.mxu0 0.0
  %56 = vmatpush1.msra.mxu0 0.0
  %57 = vmatprep.subr.mxu0 0.0
  %58 = vmatpush1.msra.mxu0 0.0
  %59 = vmatprep.subr.mxu0 0.0
  %60 = vmatpush1.msra.mxu0 0.0
  %61 = vmatprep.subr.mxu0 0.0
  %62 = vmatpush1.msra.mxu0 0.0
  %63 = vmatprep.subr.mxu0 0.0
  %64 = vmatpush1.msra.mxu0 0.0
  %65 = vmatprep.subr.mxu0 0.0
  %66 = vmatpush1.msra.mxu0 0.0
  %67 = vmatprep.subr.mxu0 0.0
  %68 = vmatpush1.msra.mxu0 0.0
  %69 = vmatprep.subr.mxu0 0.0
  %70 = vmatpush1.msra.mxu0 0.0
  %71 = vmatprep.subr.mxu0 0.0
  %72 = vmatpush1.msra.mxu0 %v39
  %73 = vmatprep.subr.mxu0 0.0
  %74 = vmatpush2.msra.mxu0 0.0
  %75 = vmatprep.subr.mxu0 0.0
  %76 = vmatpush2.msra.mxu0 0.0
  %77 = vmatprep.subr.mxu0 0.0
  %78 = vmatpush2.msra.mxu0 0.0
  %79 = vmatprep.subr.mxu0 0.0
  %80 = vmatpush2.msra.mxu0 0.0
  %81 = vmatprep.subr.mxu0 0.0
  %82 = vmatpush2.msra.mxu0 0.0
  %83 = vmatprep.subr.mxu0 0.0
  %84 = vmatpush2.msra.mxu0 0.0
  %85 = vmatprep.subr.mxu0 0.0
  %86 = vmatpush2.msra.mxu0 0.0
  %87 = vmatprep.subr.mxu0 0.0
  %88 = vmatpush2.msra.mxu0 0.0
  %89 = vmatprep.subr.mxu0 0.0
  %90 = vmatpush2.msra.mxu0 0.0
  %91 = vmatprep.subr.mxu0 0.0
  %92 = vmatpush2.msra.mxu0 0.0
  %93 = vmatprep.subr.mxu0 0.0
  %94 = vmatpush2.msra.mxu0 0.0
  %95 = vmatprep.subr.mxu0 0.0
  %96 = vmatpush2.msra.mxu0 0.0
  %97 = vmatprep.subr.mxu0 0.0
  %98 = vmatpush2.msra.mxu0 0.0
  %99 = vmatprep.subr.mxu0 0.0
  %100 = vmatpush2.msra.mxu0 0.0
  %101 = vmatprep.subr.mxu0 0.0
  %102 = vmatpush2.msra.mxu0 0.0
  %103 = vmatprep.subr.mxu0 0.0
  %104 = vmatpush2.msra.mxu0 0.0
  %105 = vmatprep.mubr.f32.mxu0 0.0
  %106 = vmatmul.mubr.f32.gmra.mxu0 %v32
  %v107 = vpop.f32.mrf.mxu0
  %v108 = vadd.f32 0.0, %v107
  %v109 = vpop.f32.mrf.mxu0
  %110 = vmatprep.mubr.f32.mxu0 0.0
  %111 = vmatmul.mubr.f32.gmra.mxu0 %v35
  %v112 = vpop.f32.mrf.mxu0
  %v113 = vadd.f32 0.0, %v112
  %v114 = vpop.f32.mrf.mxu0
  %115 = vdwg.mxu0
  %v116 = vld [vmem:[%s0] sm:$0xf]
  %v117 = vld [vmem:[%s0 + $0x4] sm:$0xf]
  %v118 = vld [vmem:[%s3] sm:$0xf]
  %v119 = vld [vmem:[%s3 + $0x4] sm:$0xf]
  %v120 = vld [vmem:[%s3 + $0x8] sm:$0xf]
  %v121 = vld [vmem:[%s3 + $0xc] sm:$0xf]
  %v122 = vld [vmem:[%s3 + $0x10] sm:$0xf]
  %v123 = vld [vmem:[%s3 + $0x14] sm:$0xf]
  %v124 = vld [vmem:[%s3 + $0x18] sm:$0xf]
  %v125 = vld [vmem:[%s3 + $0x1c] sm:$0xf]
  %v126 = vld [vmem:[%s3 + $0x20] sm:$0xf]
  %v127 = vld [vmem:[%s3 + $0x24] sm:$0xf]
  %v128 = vld [vmem:[%s3 + $0x28] sm:$0xf]
  %v129 = vld [vmem:[%s3 + $0x2c] sm:$0xf]
  %v130 = vld [vmem:[%s3 + $0x30] sm:$0xf]
  %v131 = vld [vmem:[%s3 + $0x34] sm:$0xf]
  %v132 = vld [vmem:[%s3 + $0x38] sm:$0xf]
  %v133 = vld [vmem:[%s3 + $0x3c] sm:$0xf]
  %v134 = vld [vmem:[%s4] sm:$0x1]
  %v136 = vlaneseq
  %v137 = vshrl.u32 %v136, 7
  %v138 = vsub.s32 0, %v137
  %v139 = vrot.slane %v134, %v138
  %v143 = vunpack.c.l.b16 %v116
  %v144 = vunpack.c.l.b16 %v117
  %v145 = vpack.c.b16 %v144, %v143
  %v163 = vunpack.c.l.b16 %v118
  %v164 = vunpack.c.l.b16 %v119
  %v165 = vunpack.c.l.b16 %v120
  %v166 = vunpack.c.l.b16 %v121
  %v167 = vunpack.c.l.b16 %v122
  %v168 = vunpack.c.l.b16 %v123
  %v169 = vunpack.c.l.b16 %v124
  %v170 = vunpack.c.l.b16 %v125
  %v171 = vunpack.c.l.b16 %v126
  %v172 = vunpack.c.l.b16 %v127
  %v173 = vunpack.c.l.b16 %v128
  %v174 = vunpack.c.l.b16 %v129
  %v175 = vunpack.c.l.b16 %v130
  %v176 = vunpack.c.l.b16 %v131
  %v177 = vunpack.c.l.b16 %v132
  %v178 = vunpack.c.l.b16 %v133
  %v179 = vpack.c.b16 %v164, %v163
  %v180 = vpack.c.b16 %v166, %v165
  %v181 = vpack.c.b16 %v168, %v167
  %v182 = vpack.c.b16 %v170, %v169
  %v183 = vpack.c.b16 %v172, %v171
  %v184 = vpack.c.b16 %v174, %v173
  %v185 = vpack.c.b16 %v176, %v175
  %v186 = vpack.c.b16 %v178, %v177
  %195 = vmatprep.subr.bf16.mxu0 0
  %196 = vmatpush1.bf16.msra.mxu0 %v186
  %197 = vmatprep.subr.bf16.mxu0 0
  %198 = vmatpush1.bf16.msra.mxu0 %v185
  %199 = vmatprep.subr.bf16.mxu0 0
  %200 = vmatpush1.bf16.msra.mxu0 %v184
  %201 = vmatprep.subr.bf16.mxu0 0
  %202 = vmatpush1.bf16.msra.mxu0 %v183
  %203 = vmatprep.subr.bf16.mxu0 0
  %204 = vmatpush1.bf16.msra.mxu0 %v182
  %205 = vmatprep.subr.bf16.mxu0 0
  %206 = vmatpush1.bf16.msra.mxu0 %v181
  %207 = vmatprep.subr.bf16.mxu0 0
  %208 = vmatpush1.bf16.msra.mxu0 %v180
  %209 = vmatprep.subr.bf16.mxu0 0
  %210 = vmatpush1.bf16.msra.mxu0 %v179
  %211 = vmatprep.subr.bf16.mxu0 0
  %212 = vmatpush2.bf16.msra.mxu0 0
  %213 = vmatprep.subr.bf16.mxu0 0
  %214 = vmatpush2.bf16.msra.mxu0 0
  %215 = vmatprep.subr.bf16.mxu0 0
  %216 = vmatpush2.bf16.msra.mxu0 0
  %217 = vmatprep.subr.bf16.mxu0 0
  %218 = vmatpush2.bf16.msra.mxu0 0
  %219 = vmatprep.subr.bf16.mxu0 0
  %220 = vmatpush2.bf16.msra.mxu0 0
  %221 = vmatprep.subr.bf16.mxu0 0
  %222 = vmatpush2.bf16.msra.mxu0 0
  %223 = vmatprep.subr.bf16.mxu0 0
  %224 = vmatpush2.bf16.msra.mxu0 0
  %225 = vmatprep.subr.bf16.mxu0 0
  %226 = vmatpush2.bf16.msra.mxu0 0
  %227 = vmatprep.mubr.bf16.mxu0 0
  %228 = vmatmul.mubr.bf16.gmra.mxu0 %v145
  %v229 = vpop.f32.mrf.mxu0
  %v230 = vadd.f32 %v139, %v229
  %v231 = vpop.f32.mrf.mxu0
  %v232 = vpop.f32.mrf.mxu0
  %v233 = vadd.f32 %v139, %v232
  %v234 = vpop.f32.mrf.mxu0
  %235 = vdwg.mxu0
  %v236 = vmax.f32 %v230, 0.0
  %v237 = vmax.f32 %v233, 0.0
  %v238 = vmul.f32 %v108, %v236
  %v239 = vmul.f32 %v113, %v237
  %v240 = vpack.c.bf16 %v239, %v238
  %v241 = vld [vmem:[%s5] sm:$0xf]
  %v242 = vld [vmem:[%s5 + $0x4] sm:$0xf]
  %v243 = vld [vmem:[%s5 + $0x8] sm:$0xf]
  %v244 = vld [vmem:[%s5 + $0xc] sm:$0xf]
  %v245 = vld [vmem:[%s5 + $0x10] sm:$0xf]
  %v246 = vld [vmem:[%s5 + $0x14] sm:$0xf]
  %v247 = vld [vmem:[%s5 + $0x18] sm:$0xf]
  %v248 = vld [vmem:[%s5 + $0x1c] sm:$0xf]
  %v249 = vld [vmem:[%s5 + $0x20] sm:$0xf]
  %v250 = vld [vmem:[%s5 + $0x24] sm:$0xf]
  %v251 = vld [vmem:[%s5 + $0x28] sm:$0xf]
  %v252 = vld [vmem:[%s5 + $0x2c] sm:$0xf]
  %v253 = vld [vmem:[%s5 + $0x30] sm:$0xf]
  %v254 = vld [vmem:[%s5 + $0x34] sm:$0xf]
  %v255 = vld [vmem:[%s5 + $0x38] sm:$0xf]
  %v256 = vld [vmem:[%s5 + $0x3c] sm:$0xf]
  %v257 = vld [vmem:[%s6] sm:$0x1]
  %v259 = vlaneseq
  %v260 = vshrl.u32 %v259, 7
  %v261 = vsub.s32 0, %v260
  %v262 = vrot.slane %v257, %v261
  %v280 = vunpack.c.l.b16 %v241
  %v281 = vunpack.c.l.b16 %v242
  %v282 = vunpack.c.l.b16 %v243
  %v283 = vunpack.c.l.b16 %v244
  %v284 = vunpack.c.l.b16 %v245
  %v285 = vunpack.c.l.b16 %v246
  %v286 = vunpack.c.l.b16 %v247
  %v287 = vunpack.c.l.b16 %v248
  %v288 = vunpack.c.l.b16 %v249
  %v289 = vunpack.c.l.b16 %v250
  %v290 = vunpack.c.l.b16 %v251
  %v291 = vunpack.c.l.b16 %v252
  %v292 = vunpack.c.l.b16 %v253
  %v293 = vunpack.c.l.b16 %v254
  %v294 = vunpack.c.l.b16 %v255
  %v295 = vunpack.c.l.b16 %v256
  %v296 = vpack.c.b16 %v281, %v280
  %v297 = vpack.c.b16 %v283, %v282
  %v298 = vpack.c.b16 %v285, %v284
  %v299 = vpack.c.b16 %v287, %v286
  %v300 = vpack.c.b16 %v289, %v288
  %v301 = vpack.c.b16 %v291, %v290
  %v302 = vpack.c.b16 %v293, %v292
  %v303 = vpack.c.b16 %v295, %v294
  %312 = vmatprep.subr.bf16.mxu0 0
  %313 = vmatpush1.bf16.msra.mxu0 %v303
  %314 = vmatprep.subr.bf16.mxu0 0
  %315 = vmatpush1.bf16.msra.mxu0 %v302
  %316 = vmatprep.subr.bf16.mxu0 0
  %317 = vmatpush1.bf16.msra.mxu0 %v301
  %318 = vmatprep.subr.bf16.mxu0 0
  %319 = vmatpush1.bf16.msra.mxu0 %v300
  %320 = vmatprep.subr.bf16.mxu0 0
  %321 = vmatpush1.bf16.msra.mxu0 %v299
  %322 = vmatprep.subr.bf16.mxu0 0
  %323 = vmatpush1.bf16.msra.mxu0 %v298
  %324 = vmatprep.subr.bf16.mxu0 0
  %325 = vmatpush1.bf16.msra.mxu0 %v297
  %326 = vmatprep.subr.bf16.mxu0 0
  %327 = vmatpush1.bf16.msra.mxu0 %v296
  %328 = vmatprep.subr.bf16.mxu0 0
  %329 = vmatpush2.bf16.msra.mxu0 0
  %330 = vmatprep.subr.bf16.mxu0 0
  %331 = vmatpush2.bf16.msra.mxu0 0
  %332 = vmatprep.subr.bf16.mxu0 0
  %333 = vmatpush2.bf16.msra.mxu0 0
  %334 = vmatprep.subr.bf16.mxu0 0
  %335 = vmatpush2.bf16.msra.mxu0 0
  %336 = vmatprep.subr.bf16.mxu0 0
  %337 = vmatpush2.bf16.msra.mxu0 0
  %338 = vmatprep.subr.bf16.mxu0 0
  %339 = vmatpush2.bf16.msra.mxu0 0
  %340 = vmatprep.subr.bf16.mxu0 0
  %341 = vmatpush2.bf16.msra.mxu0 0
  %342 = vmatprep.subr.bf16.mxu0 0
  %343 = vmatpush2.bf16.msra.mxu0 0
  %344 = vmatprep.mubr.bf16.mxu0 0
  %345 = vmatmul.mubr.bf16.gmra.mxu0 %v240
  %v346 = vpop.f32.mrf.mxu0
  %v347 = vadd.f32 %v262, %v346
  %v348 = vpop.f32.mrf.mxu0
  %v349 = vpop.f32.mrf.mxu0
  %v350 = vadd.f32 %v262, %v349
  %v351 = vpop.f32.mrf.mxu0
  %352 = vdwg.mxu0
  %v353 = vmax.f32 %v347, 0.0
  %v354 = vmax.f32 %v350, 0.0
  %v355 = vmul.f32 %v108, %v353
  %v356 = vmul.f32 %v113, %v354
  %v357 = vmax.f32 %v355, 0.0
  %v358 = vmax.f32 %v356, 0.0
  %359 = vst [vmem:[%s7] sm:$0xff] %v357
  %360 = vst [vmem:[%s7 + $0x8] sm:$0xff] %v358
  // Predicated region
  $region30: #{mlp_md_forward.1} parent=0 // pred_check
    _
  $region31: #{mlp_md_forward.1} parent=0 // pred_check_branch
    %362 = sbr.rel (0) target = $region33
  $region32: #{mlp_md_forward.1} parent=0 // pred_region
    _
  $region33: #{mlp_md_forward.1} parent=0 // pred_fallthru
    _
  // Predicated region
  $region34: #{mlp_md_forward.1} parent=0 // pred_check
    _
  $region35: #{mlp_md_forward.1} parent=0 // pred_check_branch
    %364 = sbr.rel (0) target = $region37
  $region36: #{mlp_md_forward.1} parent=0 // pred_region
    _
  $region37: #{mlp_md_forward.1} parent=0 // pred_fallthru
    _

</llo_original>
